<compile_context>
chip_gen: v7x
topology: tpu7x:2x2x1
jax: 0.10.0
libtpu: 0.0.40
codegen_flags: <defaults>
</compile_context>

<pallas_src>
import jax
import jax.numpy as jnp
from jax.experimental import pallas as pl
from jax.experimental.pallas import tpu as pltpu


# ----------------------------------------------------------------------------
# Fused kernel: LSTM over T steps + context->image + CLIP logits + softmax.
# Single grid point; everything (< 100 KB) lives in VMEM for the whole call.
# Gate order follows PyTorch nn.LSTM: i, f, g, o.
# ----------------------------------------------------------------------------
def final_model_kernel(x_ref, wg_ref, b_ref, w_c2i_ref, w_img_ref,
                       txt_ref, w_txt_ref, scale_ref, probs_ref):
    T = x_ref.shape[0]
    H = b_ref.shape[-1] // 4

    # Hoist loop-invariant loads out of the unrolled recurrence.
    wg = wg_ref[...]                      # (D+H, 4H) bf16, fused [W_ih; W_hh]
    b = b_ref[...]                        # (1, 4H) f32

    def step(t, carry):
        h, c = carry                      # (1, H) f32 each
        x = x_ref[t]                      # (1, D) f32
        xh = jnp.concatenate([x, h], axis=-1).astype(jnp.bfloat16)   # (1, D+H)
        gates = jnp.dot(xh, wg, preferred_element_type=jnp.float32) + b  # (1, 4H)
        i_g = jax.nn.sigmoid(gates[:, 0:H])
        f_g = jax.nn.sigmoid(gates[:, H:2 * H])
        g_g = jnp.tanh(gates[:, 2 * H:3 * H])
        o_g = jax.nn.sigmoid(gates[:, 3 * H:4 * H])
        c_new = f_g * c + i_g * g_g
        h_new = o_g * jnp.tanh(c_new)
        return h_new, c_new

    h0 = jnp.zeros((1, H), jnp.float32)
    c0 = jnp.zeros((1, H), jnp.float32)
    ctx, _ = jax.lax.fori_loop(0, T, step, (h0, c0), unroll=True)   # (1, H)

    # context_vector_to_image: (1, H) @ (H, C*IMG*IMG) -> flattened NCHW image.
    img_flat = jnp.dot(ctx.astype(jnp.bfloat16), w_c2i_ref[...],
                       preferred_element_type=jnp.float32)           # (1, F)
    # Synthetic CLIP image tower (linear projection of flattened image).
    img_emb = jnp.dot(img_flat.astype(jnp.bfloat16), w_img_ref[...],
                      preferred_element_type=jnp.float32)            # (1, E)
    # Synthetic CLIP text tower (linear projection of text features).
    txt_emb = jnp.dot(txt_ref[...].astype(jnp.bfloat16), w_txt_ref[...],
                      preferred_element_type=jnp.float32)            # (N, E)

    # L2-normalize embeddings (CLIP cosine similarity).
    img_emb = img_emb * jax.lax.rsqrt(
        jnp.sum(img_emb * img_emb, axis=-1, keepdims=True) + 1e-12)
    txt_emb = txt_emb * jax.lax.rsqrt(
        jnp.sum(txt_emb * txt_emb, axis=-1, keepdims=True) + 1e-12)

    # logits_per_image = logit_scale * img @ txt^T  (contract embed dim).
    scale = scale_ref[0]                                             # SMEM scalar
    logits = scale * jax.lax.dot_general(
        img_emb, txt_emb, (((1,), (1,)), ((), ())),
        preferred_element_type=jnp.float32)                          # (1, N)

    # softmax over dim=1 (exact division: probs must sum to 1).
    m = jnp.max(logits, axis=-1, keepdims=True)
    e = jnp.exp(logits - m)
    probs_ref[...] = e / jnp.sum(e, axis=-1, keepdims=True)


def final_model_forward(frames_seq, w_gates, bias, w_c2i, w_img,
                        txt_feats, w_txt, logit_scale):
    n_text = txt_feats.shape[0]
    vmem = lambda: pl.BlockSpec(memory_space=pltpu.MemorySpace.VMEM)
    smem = pl.BlockSpec(memory_space=pltpu.MemorySpace.SMEM)
    return pl.pallas_call(
        final_model_kernel,
        out_shape=jax.ShapeDtypeStruct((1, n_text), jnp.float32),
        in_specs=[vmem(), vmem(), vmem(), vmem(), vmem(), vmem(), vmem(), smem],
        out_specs=pl.BlockSpec(memory_space=pltpu.MemorySpace.VMEM),
    )(frames_seq, w_gates, bias, w_c2i, w_img, txt_feats, w_txt, logit_scale)


# ----------------------------------------------------------------------------
# FinalModel wrapper: deterministic synthetic parameters.
# ----------------------------------------------------------------------------
class FinalModelPallas:
    def __init__(self, key, feat_dim=32, hidden=32, img_ch=3, img_hw=8,
                 embed_dim=32, text_feat_dim=16):
        ks = jax.random.split(key, 6)
        s = 0.1
        # LSTM weights pre-transposed and fused: [x; h] @ W == x@W_ih^T + h@W_hh^T.
        w_ih_t = jax.random.normal(ks[0], (feat_dim, 4 * hidden), jnp.float32) * s
        w_hh_t = jax.random.normal(ks[1], (hidden, 4 * hidden), jnp.float32) * s
        self.w_gates = jnp.concatenate([w_ih_t, w_hh_t], axis=0).astype(jnp.bfloat16)
        self.bias = jax.random.normal(ks[2], (1, 4 * hidden), jnp.float32) * s
        F = img_ch * img_hw * img_hw
        self.w_c2i = (jax.random.normal(ks[3], (hidden, F), jnp.float32) * s
                      ).astype(jnp.bfloat16)
        self.w_img = (jax.random.normal(ks[4], (F, embed_dim), jnp.float32) * s
                      ).astype(jnp.bfloat16)
        self.w_txt = (jax.random.normal(ks[5], (text_feat_dim, embed_dim),
                                        jnp.float32) * s).astype(jnp.bfloat16)
        # CLIP default logit_scale = exp(2.6592), passed as an SMEM scalar.
        self.logit_scale = jnp.full((1,), float(jnp.exp(2.6592)), jnp.float32)
        self.img_shape = (img_ch, img_hw, img_hw)

    def __call__(self, frames, T, text_feats):
        # frames: [1, T, D] -> squeeze(0) -> [T, D] -> first T frames.
        frames = frames[0][:T]
        T_, D = frames.shape
        frames_seq = frames.reshape(T_, 1, D)
        # TODO(synk): HF CLIPProcessor image resize/normalize and tokenizer, and
        # the pretrained CLIP transformers, are replaced by synthetic linear towers.
        return final_model_forward(frames_seq, self.w_gates, self.bias,
                                   self.w_c2i, self.w_img, text_feats,
                                   self.w_txt, self.logit_scale)        # (1, N)


if __name__ == "__main__":
    key = jax.random.PRNGKey(0)
    k_frames, k_text, k_model = jax.random.split(key, 3)

    T, D = 8, 32
    frames = jax.random.normal(k_frames, (1, T, D), jnp.float32)  # [1, T, D]

    n_text, text_feat_dim = 4, 16
    # TODO(synk): tokenizer (processor text path) for `final` strings not modeled;
    # deterministic synthetic per-text features are used instead.
    text_feats = jax.random.normal(k_text, (n_text, text_feat_dim), jnp.float32)

    model = FinalModelPallas(k_model, feat_dim=D)
    probs = model(frames, T, text_feats)
    probs = jax.block_until_ready(probs)

    assert probs.shape == (1, n_text)
    assert bool(jnp.all(probs >= 0.0))
    assert bool(jnp.allclose(jnp.sum(probs, axis=1), 1.0, atol=1e-5))
    print("KERNEL_OK")
</pallas_src>

<mosaic_0001>
module attributes {stable_mosaic.version = 11 : i64} {
  func.func @final_model_kernel(%arg0: memref<8x1x32xf32, #tpu.memory_space<vmem>>, %arg1: memref<64x128xbf16, #tpu.memory_space<vmem>>, %arg2: memref<1x128xf32, #tpu.memory_space<vmem>>, %arg3: memref<32x192xbf16, #tpu.memory_space<vmem>>, %arg4: memref<192x32xbf16, #tpu.memory_space<vmem>>, %arg5: memref<4x16xf32, #tpu.memory_space<vmem>>, %arg6: memref<16x32xbf16, #tpu.memory_space<vmem>>, %arg7: memref<1xf32, #tpu.memory_space<smem>>, %arg8: memref<1x4xf32, #tpu.memory_space<vmem>>) attributes {dimension_semantics = [], scalar_prefetch = 0 : i64, scratch_operands = 0 : i64, tpu.core_type = #tpu.core_type<tc>} {
    %c0 = arith.constant 0 : index
    %c0_0 = arith.constant 0 : index
    %0 = vector.load %arg1[%c0, %c0_0] : memref<64x128xbf16, #tpu.memory_space<vmem>>, vector<64x128xbf16>
    %c0_1 = arith.constant 0 : index
    %c0_2 = arith.constant 0 : index
    %1 = vector.load %arg2[%c0_1, %c0_2] : memref<1x128xf32, #tpu.memory_space<vmem>>, vector<1x128xf32>
    %cst = arith.constant 0.000000e+00 : f32
    %2 = vector.broadcast %cst : f32 to vector<1x32xf32>
    %cst_3 = arith.constant 0.000000e+00 : f32
    %3 = vector.broadcast %cst_3 : f32 to vector<1x32xf32>
    %c0_i32 = arith.constant 0 : i32
    %4 = arith.index_cast %c0_i32 : i32 to index
    %c0_4 = arith.constant 0 : index
    %c0_5 = arith.constant 0 : index
    %5 = vector.load %arg0[%4, %c0_4, %c0_5] : memref<8x1x32xf32, #tpu.memory_space<vmem>>, vector<1x1x32xf32>
    %6 = vector.shape_cast %5 : vector<1x1x32xf32> to vector<1x32xf32>
    %7 = tpu.concatenate %6, %2 in 1 : vector<1x32xf32>, vector<1x32xf32> -> vector<1x64xf32>
    %8 = arith.truncf %7 : vector<1x64xf32> to vector<1x64xbf16>
    %cst_6 = arith.constant dense<0.000000e+00> : vector<1x128xf32>
    %9 = tpu.matmul %8, %0, %cst_6 {dimension_numbers = #tpu.dot_dimension_numbers<[1], [0], [0], [1], [0, 0, 1, 1], [], []>} : vector<1x64xbf16>, vector<64x128xbf16>, vector<1x128xf32> -> vector<1x128xf32>
    %10 = arith.addf %9, %1 : vector<1x128xf32>
    %11 = vector.extract_strided_slice %10 {offsets = [0, 0], sizes = [1, 32], strides = [1, 1]} : vector<1x128xf32> to vector<1x32xf32>
    %12 = arith.negf %11 : vector<1x32xf32>
    %13 = math.exp %12 : vector<1x32xf32>
    %cst_7 = arith.constant 1.000000e+00 : f32
    %14 = vector.broadcast %cst_7 : f32 to vector<1x32xf32>
    %15 = arith.addf %14, %13 : vector<1x32xf32>
    %16 = arith.divf %14, %15 : vector<1x32xf32>
    %17 = vector.extract_strided_slice %10 {offsets = [0, 32], sizes = [1, 32], strides = [1, 1]} : vector<1x128xf32> to vector<1x32xf32>
    %18 = arith.negf %17 : vector<1x32xf32>
    %19 = math.exp %18 : vector<1x32xf32>
    %cst_8 = arith.constant 1.000000e+00 : f32
    %20 = vector.broadcast %cst_8 : f32 to vector<1x32xf32>
    %21 = arith.addf %20, %19 : vector<1x32xf32>
    %22 = arith.divf %20, %21 : vector<1x32xf32>
    %23 = vector.extract_strided_slice %10 {offsets = [0, 64], sizes = [1, 32], strides = [1, 1]} : vector<1x128xf32> to vector<1x32xf32>
    %24 = math.tanh %23 : vector<1x32xf32>
    %25 = vector.extract_strided_slice %10 {offsets = [0, 96], sizes = [1, 32], strides = [1, 1]} : vector<1x128xf32> to vector<1x32xf32>
    %26 = arith.negf %25 : vector<1x32xf32>
    %27 = math.exp %26 : vector<1x32xf32>
    %cst_9 = arith.constant 1.000000e+00 : f32
    %28 = vector.broadcast %cst_9 : f32 to vector<1x32xf32>
    %29 = arith.addf %28, %27 : vector<1x32xf32>
    %30 = arith.divf %28, %29 : vector<1x32xf32>
    %31 = arith.mulf %22, %3 : vector<1x32xf32>
    %32 = arith.mulf %16, %24 : vector<1x32xf32>
    %33 = arith.addf %31, %32 : vector<1x32xf32>
    %34 = math.tanh %33 : vector<1x32xf32>
    %35 = arith.mulf %30, %34 : vector<1x32xf32>
    %c1_i32 = arith.constant 1 : i32
    %36 = arith.index_cast %c1_i32 : i32 to index
    %c0_10 = arith.constant 0 : index
    %c0_11 = arith.constant 0 : index
    %37 = vector.load %arg0[%36, %c0_10, %c0_11] : memref<8x1x32xf32, #tpu.memory_space<vmem>>, vector<1x1x32xf32>
    %38 = vector.shape_cast %37 : vector<1x1x32xf32> to vector<1x32xf32>
    %39 = tpu.concatenate %38, %35 in 1 : vector<1x32xf32>, vector<1x32xf32> -> vector<1x64xf32>
    %40 = arith.truncf %39 : vector<1x64xf32> to vector<1x64xbf16>
    %cst_12 = arith.constant dense<0.000000e+00> : vector<1x128xf32>
    %41 = tpu.matmul %40, %0, %cst_12 {dimension_numbers = #tpu.dot_dimension_numbers<[1], [0], [0], [1], [0, 0, 1, 1], [], []>} : vector<1x64xbf16>, vector<64x128xbf16>, vector<1x128xf32> -> vector<1x128xf32>
    %42 = arith.addf %41, %1 : vector<1x128xf32>
    %43 = vector.extract_strided_slice %42 {offsets = [0, 0], sizes = [1, 32], strides = [1, 1]} : vector<1x128xf32> to vector<1x32xf32>
    %44 = arith.negf %43 : vector<1x32xf32>
    %45 = math.exp %44 : vector<1x32xf32>
    %cst_13 = arith.constant 1.000000e+00 : f32
    %46 = vector.broadcast %cst_13 : f32 to vector<1x32xf32>
    %47 = arith.addf %46, %45 : vector<1x32xf32>
    %48 = arith.divf %46, %47 : vector<1x32xf32>
    %49 = vector.extract_strided_slice %42 {offsets = [0, 32], sizes = [1, 32], strides = [1, 1]} : vector<1x128xf32> to vector<1x32xf32>
    %50 = arith.negf %49 : vector<1x32xf32>
    %51 = math.exp %50 : vector<1x32xf32>
    %cst_14 = arith.constant 1.000000e+00 : f32
    %52 = vector.broadcast %cst_14 : f32 to vector<1x32xf32>
    %53 = arith.addf %52, %51 : vector<1x32xf32>
    %54 = arith.divf %52, %53 : vector<1x32xf32>
    %55 = vector.extract_strided_slice %42 {offsets = [0, 64], sizes = [1, 32], strides = [1, 1]} : vector<1x128xf32> to vector<1x32xf32>
    %56 = math.tanh %55 : vector<1x32xf32>
    %57 = vector.extract_strided_slice %42 {offsets = [0, 96], sizes = [1, 32], strides = [1, 1]} : vector<1x128xf32> to vector<1x32xf32>
    %58 = arith.negf %57 : vector<1x32xf32>
    %59 = math.exp %58 : vector<1x32xf32>
    %cst_15 = arith.constant 1.000000e+00 : f32
    %60 = vector.broadcast %cst_15 : f32 to vector<1x32xf32>
    %61 = arith.addf %60, %59 : vector<1x32xf32>
    %62 = arith.divf %60, %61 : vector<1x32xf32>
    %63 = arith.mulf %54, %33 : vector<1x32xf32>
    %64 = arith.mulf %48, %56 : vector<1x32xf32>
    %65 = arith.addf %63, %64 : vector<1x32xf32>
    %66 = math.tanh %65 : vector<1x32xf32>
    %67 = arith.mulf %62, %66 : vector<1x32xf32>
    %c2_i32 = arith.constant 2 : i32
    %68 = arith.index_cast %c2_i32 : i32 to index
    %c0_16 = arith.constant 0 : index
    %c0_17 = arith.constant 0 : index
    %69 = vector.load %arg0[%68, %c0_16, %c0_17] : memref<8x1x32xf32, #tpu.memory_space<vmem>>, vector<1x1x32xf32>
    %70 = vector.shape_cast %69 : vector<1x1x32xf32> to vector<1x32xf32>
    %71 = tpu.concatenate %70, %67 in 1 : vector<1x32xf32>, vector<1x32xf32> -> vector<1x64xf32>
    %72 = arith.truncf %71 : vector<1x64xf32> to vector<1x64xbf16>
    %cst_18 = arith.constant dense<0.000000e+00> : vector<1x128xf32>
    %73 = tpu.matmul %72, %0, %cst_18 {dimension_numbers = #tpu.dot_dimension_numbers<[1], [0], [0], [1], [0, 0, 1, 1], [], []>} : vector<1x64xbf16>, vector<64x128xbf16>, vector<1x128xf32> -> vector<1x128xf32>
    %74 = arith.addf %73, %1 : vector<1x128xf32>
    %75 = vector.extract_strided_slice %74 {offsets = [0, 0], sizes = [1, 32], strides = [1, 1]} : vector<1x128xf32> to vector<1x32xf32>
    %76 = arith.negf %75 : vector<1x32xf32>
    %77 = math.exp %76 : vector<1x32xf32>
    %cst_19 = arith.constant 1.000000e+00 : f32
    %78 = vector.broadcast %cst_19 : f32 to vector<1x32xf32>
    %79 = arith.addf %78, %77 : vector<1x32xf32>
    %80 = arith.divf %78, %79 : vector<1x32xf32>
    %81 = vector.extract_strided_slice %74 {offsets = [0, 32], sizes = [1, 32], strides = [1, 1]} : vector<1x128xf32> to vector<1x32xf32>
    %82 = arith.negf %81 : vector<1x32xf32>
    %83 = math.exp %82 : vector<1x32xf32>
    %cst_20 = arith.constant 1.000000e+00 : f32
    %84 = vector.broadcast %cst_20 : f32 to vector<1x32xf32>
    %85 = arith.addf %84, %83 : vector<1x32xf32>
    %86 = arith.divf %84, %85 : vector<1x32xf32>
    %87 = vector.extract_strided_slice %74 {offsets = [0, 64], sizes = [1, 32], strides = [1, 1]} : vector<1x128xf32> to vector<1x32xf32>
    %88 = math.tanh %87 : vector<1x32xf32>
    %89 = vector.extract_strided_slice %74 {offsets = [0, 96], sizes = [1, 32], strides = [1, 1]} : vector<1x128xf32> to vector<1x32xf32>
    %90 = arith.negf %89 : vector<1x32xf32>
    %91 = math.exp %90 : vector<1x32xf32>
    %cst_21 = arith.constant 1.000000e+00 : f32
    %92 = vector.broadcast %cst_21 : f32 to vector<1x32xf32>
    %93 = arith.addf %92, %91 : vector<1x32xf32>
    %94 = arith.divf %92, %93 : vector<1x32xf32>
    %95 = arith.mulf %86, %65 : vector<1x32xf32>
    %96 = arith.mulf %80, %88 : vector<1x32xf32>
    %97 = arith.addf %95, %96 : vector<1x32xf32>
    %98 = math.tanh %97 : vector<1x32xf32>
    %99 = arith.mulf %94, %98 : vector<1x32xf32>
    %c3_i32 = arith.constant 3 : i32
    %100 = arith.index_cast %c3_i32 : i32 to index
    %c0_22 = arith.constant 0 : index
    %c0_23 = arith.constant 0 : index
    %101 = vector.load %arg0[%100, %c0_22, %c0_23] : memref<8x1x32xf32, #tpu.memory_space<vmem>>, vector<1x1x32xf32>
    %102 = vector.shape_cast %101 : vector<1x1x32xf32> to vector<1x32xf32>
    %103 = tpu.concatenate %102, %99 in 1 : vector<1x32xf32>, vector<1x32xf32> -> vector<1x64xf32>
    %104 = arith.truncf %103 : vector<1x64xf32> to vector<1x64xbf16>
    %cst_24 = arith.constant dense<0.000000e+00> : vector<1x128xf32>
    %105 = tpu.matmul %104, %0, %cst_24 {dimension_numbers = #tpu.dot_dimension_numbers<[1], [0], [0], [1], [0, 0, 1, 1], [], []>} : vector<1x64xbf16>, vector<64x128xbf16>, vector<1x128xf32> -> vector<1x128xf32>
    %106 = arith.addf %105, %1 : vector<1x128xf32>
    %107 = vector.extract_strided_slice %106 {offsets = [0, 0], sizes = [1, 32], strides = [1, 1]} : vector<1x128xf32> to vector<1x32xf32>
    %108 = arith.negf %107 : vector<1x32xf32>
    %109 = math.exp %108 : vector<1x32xf32>
    %cst_25 = arith.constant 1.000000e+00 : f32
    %110 = vector.broadcast %cst_25 : f32 to vector<1x32xf32>
    %111 = arith.addf %110, %109 : vector<1x32xf32>
    %112 = arith.divf %110, %111 : vector<1x32xf32>
    %113 = vector.extract_strided_slice %106 {offsets = [0, 32], sizes = [1, 32], strides = [1, 1]} : vector<1x128xf32> to vector<1x32xf32>
    %114 = arith.negf %113 : vector<1x32xf32>
    %115 = math.exp %114 : vector<1x32xf32>
    %cst_26 = arith.constant 1.000000e+00 : f32
    %116 = vector.broadcast %cst_26 : f32 to vector<1x32xf32>
    %117 = arith.addf %116, %115 : vector<1x32xf32>
    %118 = arith.divf %116, %117 : vector<1x32xf32>
    %119 = vector.extract_strided_slice %106 {offsets = [0, 64], sizes = [1, 32], strides = [1, 1]} : vector<1x128xf32> to vector<1x32xf32>
    %120 = math.tanh %119 : vector<1x32xf32>
    %121 = vector.extract_strided_slice %106 {offsets = [0, 96], sizes = [1, 32], strides = [1, 1]} : vector<1x128xf32> to vector<1x32xf32>
    %122 = arith.negf %121 : vector<1x32xf32>
    %123 = math.exp %122 : vector<1x32xf32>
    %cst_27 = arith.constant 1.000000e+00 : f32
    %124 = vector.broadcast %cst_27 : f32 to vector<1x32xf32>
    %125 = arith.addf %124, %123 : vector<1x32xf32>
    %126 = arith.divf %124, %125 : vector<1x32xf32>
    %127 = arith.mulf %118, %97 : vector<1x32xf32>
    %128 = arith.mulf %112, %120 : vector<1x32xf32>
    %129 = arith.addf %127, %128 : vector<1x32xf32>
    %130 = math.tanh %129 : vector<1x32xf32>
    %131 = arith.mulf %126, %130 : vector<1x32xf32>
    %c4_i32 = arith.constant 4 : i32
    %132 = arith.index_cast %c4_i32 : i32 to index
    %c0_28 = arith.constant 0 : index
    %c0_29 = arith.constant 0 : index
    %133 = vector.load %arg0[%132, %c0_28, %c0_29] : memref<8x1x32xf32, #tpu.memory_space<vmem>>, vector<1x1x32xf32>
    %134 = vector.shape_cast %133 : vector<1x1x32xf32> to vector<1x32xf32>
    %135 = tpu.concatenate %134, %131 in 1 : vector<1x32xf32>, vector<1x32xf32> -> vector<1x64xf32>
    %136 = arith.truncf %135 : vector<1x64xf32> to vector<1x64xbf16>
    %cst_30 = arith.constant dense<0.000000e+00> : vector<1x128xf32>
    %137 = tpu.matmul %136, %0, %cst_30 {dimension_numbers = #tpu.dot_dimension_numbers<[1], [0], [0], [1], [0, 0, 1, 1], [], []>} : vector<1x64xbf16>, vector<64x128xbf16>, vector<1x128xf32> -> vector<1x128xf32>
    %138 = arith.addf %137, %1 : vector<1x128xf32>
    %139 = vector.extract_strided_slice %138 {offsets = [0, 0], sizes = [1, 32], strides = [1, 1]} : vector<1x128xf32> to vector<1x32xf32>
    %140 = arith.negf %139 : vector<1x32xf32>
    %141 = math.exp %140 : vector<1x32xf32>
    %cst_31 = arith.constant 1.000000e+00 : f32
    %142 = vector.broadcast %cst_31 : f32 to vector<1x32xf32>
    %143 = arith.addf %142, %141 : vector<1x32xf32>
    %144 = arith.divf %142, %143 : vector<1x32xf32>
    %145 = vector.extract_strided_slice %138 {offsets = [0, 32], sizes = [1, 32], strides = [1, 1]} : vector<1x128xf32> to vector<1x32xf32>
    %146 = arith.negf %145 : vector<1x32xf32>
    %147 = math.exp %146 : vector<1x32xf32>
    %cst_32 = arith.constant 1.000000e+00 : f32
    %148 = vector.broadcast %cst_32 : f32 to vector<1x32xf32>
    %149 = arith.addf %148, %147 : vector<1x32xf32>
    %150 = arith.divf %148, %149 : vector<1x32xf32>
    %151 = vector.extract_strided_slice %138 {offsets = [0, 64], sizes = [1, 32], strides = [1, 1]} : vector<1x128xf32> to vector<1x32xf32>
    %152 = math.tanh %151 : vector<1x32xf32>
    %153 = vector.extract_strided_slice %138 {offsets = [0, 96], sizes = [1, 32], strides = [1, 1]} : vector<1x128xf32> to vector<1x32xf32>
    %154 = arith.negf %153 : vector<1x32xf32>
    %155 = math.exp %154 : vector<1x32xf32>
    %cst_33 = arith.constant 1.000000e+00 : f32
    %156 = vector.broadcast %cst_33 : f32 to vector<1x32xf32>
    %157 = arith.addf %156, %155 : vector<1x32xf32>
    %158 = arith.divf %156, %157 : vector<1x32xf32>
    %159 = arith.mulf %150, %129 : vector<1x32xf32>
    %160 = arith.mulf %144, %152 : vector<1x32xf32>
    %161 = arith.addf %159, %160 : vector<1x32xf32>
    %162 = math.tanh %161 : vector<1x32xf32>
    %163 = arith.mulf %158, %162 : vector<1x32xf32>
    %c5_i32 = arith.constant 5 : i32
    %164 = arith.index_cast %c5_i32 : i32 to index
    %c0_34 = arith.constant 0 : index
    %c0_35 = arith.constant 0 : index
    %165 = vector.load %arg0[%164, %c0_34, %c0_35] : memref<8x1x32xf32, #tpu.memory_space<vmem>>, vector<1x1x32xf32>
    %166 = vector.shape_cast %165 : vector<1x1x32xf32> to vector<1x32xf32>
    %167 = tpu.concatenate %166, %163 in 1 : vector<1x32xf32>, vector<1x32xf32> -> vector<1x64xf32>
    %168 = arith.truncf %167 : vector<1x64xf32> to vector<1x64xbf16>
    %cst_36 = arith.constant dense<0.000000e+00> : vector<1x128xf32>
    %169 = tpu.matmul %168, %0, %cst_36 {dimension_numbers = #tpu.dot_dimension_numbers<[1], [0], [0], [1], [0, 0, 1, 1], [], []>} : vector<1x64xbf16>, vector<64x128xbf16>, vector<1x128xf32> -> vector<1x128xf32>
    %170 = arith.addf %169, %1 : vector<1x128xf32>
    %171 = vector.extract_strided_slice %170 {offsets = [0, 0], sizes = [1, 32], strides = [1, 1]} : vector<1x128xf32> to vector<1x32xf32>
    %172 = arith.negf %171 : vector<1x32xf32>
    %173 = math.exp %172 : vector<1x32xf32>
    %cst_37 = arith.constant 1.000000e+00 : f32
    %174 = vector.broadcast %cst_37 : f32 to vector<1x32xf32>
    %175 = arith.addf %174, %173 : vector<1x32xf32>
    %176 = arith.divf %174, %175 : vector<1x32xf32>
    %177 = vector.extract_strided_slice %170 {offsets = [0, 32], sizes = [1, 32], strides = [1, 1]} : vector<1x128xf32> to vector<1x32xf32>
    %178 = arith.negf %177 : vector<1x32xf32>
    %179 = math.exp %178 : vector<1x32xf32>
    %cst_38 = arith.constant 1.000000e+00 : f32
    %180 = vector.broadcast %cst_38 : f32 to vector<1x32xf32>
    %181 = arith.addf %180, %179 : vector<1x32xf32>
    %182 = arith.divf %180, %181 : vector<1x32xf32>
    %183 = vector.extract_strided_slice %170 {offsets = [0, 64], sizes = [1, 32], strides = [1, 1]} : vector<1x128xf32> to vector<1x32xf32>
    %184 = math.tanh %183 : vector<1x32xf32>
    %185 = vector.extract_strided_slice %170 {offsets = [0, 96], sizes = [1, 32], strides = [1, 1]} : vector<1x128xf32> to vector<1x32xf32>
    %186 = arith.negf %185 : vector<1x32xf32>
    %187 = math.exp %186 : vector<1x32xf32>
    %cst_39 = arith.constant 1.000000e+00 : f32
    %188 = vector.broadcast %cst_39 : f32 to vector<1x32xf32>
    %189 = arith.addf %188, %187 : vector<1x32xf32>
    %190 = arith.divf %188, %189 : vector<1x32xf32>
    %191 = arith.mulf %182, %161 : vector<1x32xf32>
    %192 = arith.mulf %176, %184 : vector<1x32xf32>
    %193 = arith.addf %191, %192 : vector<1x32xf32>
    %194 = math.tanh %193 : vector<1x32xf32>
    %195 = arith.mulf %190, %194 : vector<1x32xf32>
    %c6_i32 = arith.constant 6 : i32
    %196 = arith.index_cast %c6_i32 : i32 to index
    %c0_40 = arith.constant 0 : index
    %c0_41 = arith.constant 0 : index
    %197 = vector.load %arg0[%196, %c0_40, %c0_41] : memref<8x1x32xf32, #tpu.memory_space<vmem>>, vector<1x1x32xf32>
    %198 = vector.shape_cast %197 : vector<1x1x32xf32> to vector<1x32xf32>
    %199 = tpu.concatenate %198, %195 in 1 : vector<1x32xf32>, vector<1x32xf32> -> vector<1x64xf32>
    %200 = arith.truncf %199 : vector<1x64xf32> to vector<1x64xbf16>
    %cst_42 = arith.constant dense<0.000000e+00> : vector<1x128xf32>
    %201 = tpu.matmul %200, %0, %cst_42 {dimension_numbers = #tpu.dot_dimension_numbers<[1], [0], [0], [1], [0, 0, 1, 1], [], []>} : vector<1x64xbf16>, vector<64x128xbf16>, vector<1x128xf32> -> vector<1x128xf32>
    %202 = arith.addf %201, %1 : vector<1x128xf32>
    %203 = vector.extract_strided_slice %202 {offsets = [0, 0], sizes = [1, 32], strides = [1, 1]} : vector<1x128xf32> to vector<1x32xf32>
    %204 = arith.negf %203 : vector<1x32xf32>
    %205 = math.exp %204 : vector<1x32xf32>
    %cst_43 = arith.constant 1.000000e+00 : f32
    %206 = vector.broadcast %cst_43 : f32 to vector<1x32xf32>
    %207 = arith.addf %206, %205 : vector<1x32xf32>
    %208 = arith.divf %206, %207 : vector<1x32xf32>
    %209 = vector.extract_strided_slice %202 {offsets = [0, 32], sizes = [1, 32], strides = [1, 1]} : vector<1x128xf32> to vector<1x32xf32>
    %210 = arith.negf %209 : vector<1x32xf32>
    %211 = math.exp %210 : vector<1x32xf32>
    %cst_44 = arith.constant 1.000000e+00 : f32
    %212 = vector.broadcast %cst_44 : f32 to vector<1x32xf32>
    %213 = arith.addf %212, %211 : vector<1x32xf32>
    %214 = arith.divf %212, %213 : vector<1x32xf32>
    %215 = vector.extract_strided_slice %202 {offsets = [0, 64], sizes = [1, 32], strides = [1, 1]} : vector<1x128xf32> to vector<1x32xf32>
    %216 = math.tanh %215 : vector<1x32xf32>
    %217 = vector.extract_strided_slice %202 {offsets = [0, 96], sizes = [1, 32], strides = [1, 1]} : vector<1x128xf32> to vector<1x32xf32>
    %218 = arith.negf %217 : vector<1x32xf32>
    %219 = math.exp %218 : vector<1x32xf32>
    %cst_45 = arith.constant 1.000000e+00 : f32
    %220 = vector.broadcast %cst_45 : f32 to vector<1x32xf32>
    %221 = arith.addf %220, %219 : vector<1x32xf32>
    %222 = arith.divf %220, %221 : vector<1x32xf32>
    %223 = arith.mulf %214, %193 : vector<1x32xf32>
    %224 = arith.mulf %208, %216 : vector<1x32xf32>
    %225 = arith.addf %223, %224 : vector<1x32xf32>
    %226 = math.tanh %225 : vector<1x32xf32>
    %227 = arith.mulf %222, %226 : vector<1x32xf32>
    %c7_i32 = arith.constant 7 : i32
    %228 = arith.index_cast %c7_i32 : i32 to index
    %c0_46 = arith.constant 0 : index
    %c0_47 = arith.constant 0 : index
    %229 = vector.load %arg0[%228, %c0_46, %c0_47] : memref<8x1x32xf32, #tpu.memory_space<vmem>>, vector<1x1x32xf32>
    %230 = vector.shape_cast %229 : vector<1x1x32xf32> to vector<1x32xf32>
    %231 = tpu.concatenate %230, %227 in 1 : vector<1x32xf32>, vector<1x32xf32> -> vector<1x64xf32>
    %232 = arith.truncf %231 : vector<1x64xf32> to vector<1x64xbf16>
    %cst_48 = arith.constant dense<0.000000e+00> : vector<1x128xf32>
    %233 = tpu.matmul %232, %0, %cst_48 {dimension_numbers = #tpu.dot_dimension_numbers<[1], [0], [0], [1], [0, 0, 1, 1], [], []>} : vector<1x64xbf16>, vector<64x128xbf16>, vector<1x128xf32> -> vector<1x128xf32>
    %234 = arith.addf %233, %1 : vector<1x128xf32>
    %235 = vector.extract_strided_slice %234 {offsets = [0, 0], sizes = [1, 32], strides = [1, 1]} : vector<1x128xf32> to vector<1x32xf32>
    %236 = arith.negf %235 : vector<1x32xf32>
    %237 = math.exp %236 : vector<1x32xf32>
    %cst_49 = arith.constant 1.000000e+00 : f32
    %238 = vector.broadcast %cst_49 : f32 to vector<1x32xf32>
    %239 = arith.addf %238, %237 : vector<1x32xf32>
    %240 = arith.divf %238, %239 : vector<1x32xf32>
    %241 = vector.extract_strided_slice %234 {offsets = [0, 32], sizes = [1, 32], strides = [1, 1]} : vector<1x128xf32> to vector<1x32xf32>
    %242 = arith.negf %241 : vector<1x32xf32>
    %243 = math.exp %242 : vector<1x32xf32>
    %cst_50 = arith.constant 1.000000e+00 : f32
    %244 = vector.broadcast %cst_50 : f32 to vector<1x32xf32>
    %245 = arith.addf %244, %243 : vector<1x32xf32>
    %246 = arith.divf %244, %245 : vector<1x32xf32>
    %247 = vector.extract_strided_slice %234 {offsets = [0, 64], sizes = [1, 32], strides = [1, 1]} : vector<1x128xf32> to vector<1x32xf32>
    %248 = math.tanh %247 : vector<1x32xf32>
    %249 = vector.extract_strided_slice %234 {offsets = [0, 96], sizes = [1, 32], strides = [1, 1]} : vector<1x128xf32> to vector<1x32xf32>
    %250 = arith.negf %249 : vector<1x32xf32>
    %251 = math.exp %250 : vector<1x32xf32>
    %cst_51 = arith.constant 1.000000e+00 : f32
    %252 = vector.broadcast %cst_51 : f32 to vector<1x32xf32>
    %253 = arith.addf %252, %251 : vector<1x32xf32>
    %254 = arith.divf %252, %253 : vector<1x32xf32>
    %255 = arith.mulf %246, %225 : vector<1x32xf32>
    %256 = arith.mulf %240, %248 : vector<1x32xf32>
    %257 = arith.addf %255, %256 : vector<1x32xf32>
    %258 = math.tanh %257 : vector<1x32xf32>
    %259 = arith.mulf %254, %258 : vector<1x32xf32>
    %c8_i32 = arith.constant 8 : i32
    %260 = arith.truncf %259 : vector<1x32xf32> to vector<1x32xbf16>
    %c0_52 = arith.constant 0 : index
    %c0_53 = arith.constant 0 : index
    %261 = vector.load %arg3[%c0_52, %c0_53] : memref<32x192xbf16, #tpu.memory_space<vmem>>, vector<32x192xbf16>
    %cst_54 = arith.constant dense<0.000000e+00> : vector<1x192xf32>
    %262 = tpu.matmul %260, %261, %cst_54 {dimension_numbers = #tpu.dot_dimension_numbers<[1], [0], [0], [1], [0, 0, 1, 1], [], []>} : vector<1x32xbf16>, vector<32x192xbf16>, vector<1x192xf32> -> vector<1x192xf32>
    %263 = arith.truncf %262 : vector<1x192xf32> to vector<1x192xbf16>
    %c0_55 = arith.constant 0 : index
    %c0_56 = arith.constant 0 : index
    %264 = vector.load %arg4[%c0_55, %c0_56] : memref<192x32xbf16, #tpu.memory_space<vmem>>, vector<192x32xbf16>
    %cst_57 = arith.constant dense<0.000000e+00> : vector<1x32xf32>
    %265 = tpu.matmul %263, %264, %cst_57 {dimension_numbers = #tpu.dot_dimension_numbers<[1], [0], [0], [1], [0, 0, 1, 1], [], []>} : vector<1x192xbf16>, vector<192x32xbf16>, vector<1x32xf32> -> vector<1x32xf32>
    %c0_58 = arith.constant 0 : index
    %c0_59 = arith.constant 0 : index
    %266 = vector.load %arg5[%c0_58, %c0_59] : memref<4x16xf32, #tpu.memory_space<vmem>>, vector<4x16xf32>
    %267 = arith.truncf %266 : vector<4x16xf32> to vector<4x16xbf16>
    %c0_60 = arith.constant 0 : index
    %c0_61 = arith.constant 0 : index
    %268 = vector.load %arg6[%c0_60, %c0_61] : memref<16x32xbf16, #tpu.memory_space<vmem>>, vector<16x32xbf16>
    %cst_62 = arith.constant dense<0.000000e+00> : vector<4x32xf32>
    %269 = tpu.matmul %267, %268, %cst_62 {dimension_numbers = #tpu.dot_dimension_numbers<[1], [0], [0], [1], [0, 0, 1, 1], [], []>} : vector<4x16xbf16>, vector<16x32xbf16>, vector<4x32xf32> -> vector<4x32xf32>
    %270 = arith.mulf %265, %265 : vector<1x32xf32>
    %cst_63 = arith.constant dense<0.000000e+00> : vector<1xf32>
    %271 = vector.multi_reduction <add>, %270, %cst_63 [1] : vector<1x32xf32> to vector<1xf32>
    %272 = vector.shape_cast %271 : vector<1xf32> to vector<1x1xf32>
    %cst_64 = arith.constant 9.99999996E-13 : f32
    %273 = vector.broadcast %cst_64 : f32 to vector<1x1xf32>
    %274 = arith.addf %272, %273 : vector<1x1xf32>
    %275 = math.rsqrt %274 : vector<1x1xf32>
    %276 = vector.broadcast %275 : vector<1x1xf32> to vector<1x32xf32>
    %277 = arith.mulf %265, %276 : vector<1x32xf32>
    %278 = arith.mulf %269, %269 : vector<4x32xf32>
    %cst_65 = arith.constant dense<0.000000e+00> : vector<4xf32>
    %279 = vector.multi_reduction <add>, %278, %cst_65 [1] : vector<4x32xf32> to vector<4xf32>
    %280 = vector.shape_cast %279 : vector<4xf32> to vector<4x1xf32>
    %cst_66 = arith.constant 9.99999996E-13 : f32
    %281 = vector.broadcast %cst_66 : f32 to vector<4x1xf32>
    %282 = arith.addf %280, %281 : vector<4x1xf32>
    %283 = math.rsqrt %282 : vector<4x1xf32>
    %284 = vector.broadcast %283 : vector<4x1xf32> to vector<4x32xf32>
    %285 = arith.mulf %269, %284 : vector<4x32xf32>
    %c0_67 = arith.constant 0 : index
    %286 = memref.load %arg7[%c0_67] : memref<1xf32, #tpu.memory_space<smem>>
    %cst_68 = arith.constant dense<0.000000e+00> : vector<1x4xf32>
    %287 = tpu.matmul %277, %285, %cst_68 {dimension_numbers = #tpu.dot_dimension_numbers<[1], [1], [0], [0], [0, 0, 1, 0], [], []>} : vector<1x32xf32>, vector<4x32xf32>, vector<1x4xf32> -> vector<1x4xf32>
    %288 = vector.broadcast %286 : f32 to vector<1x4xf32>
    %289 = arith.mulf %288, %287 : vector<1x4xf32>
    %cst_69 = arith.constant dense<0xFF800000> : vector<1xf32>
    %290 = vector.multi_reduction <maximumf>, %289, %cst_69 [1] : vector<1x4xf32> to vector<1xf32>
    %291 = vector.shape_cast %290 : vector<1xf32> to vector<1x1xf32>
    %292 = vector.broadcast %291 : vector<1x1xf32> to vector<1x4xf32>
    %293 = arith.subf %289, %292 : vector<1x4xf32>
    %294 = math.exp %293 : vector<1x4xf32>
    %cst_70 = arith.constant dense<0.000000e+00> : vector<1xf32>
    %295 = vector.multi_reduction <add>, %294, %cst_70 [1] : vector<1x4xf32> to vector<1xf32>
    %296 = vector.shape_cast %295 : vector<1xf32> to vector<1x1xf32>
    %297 = vector.broadcast %296 : vector<1x1xf32> to vector<1x4xf32>
    %298 = arith.divf %294, %297 : vector<1x4xf32>
    %c0_71 = arith.constant 0 : index
    %c0_72 = arith.constant 0 : index
    %299 = vector.load %arg8[%c0_71, %c0_72] : memref<1x4xf32, #tpu.memory_space<vmem>>, vector<1x4xf32>
    tpu.vector_store %arg8[%c0_71, %c0_72], %298 {strides = array<i32>} : memref<1x4xf32, #tpu.memory_space<vmem>>, vector<1x4xf32>,
    return
  }
}

</mosaic_0001>

<llo_original>
// kernel: tpu_custom_call.1
$region0: #{tpu_custom_call.1}
  #allocation0 [shape = 'u32[]', space=smem, size = 0x4, offset = 0x4, fixed_abs, tag = 'smem constant byte address 0x4 - core index']
  #allocation1 [shape = 'u32[144,128]{1,0:T(1,128)}', space=vmem, size = 0x12000, scoped, tag = 'internal scratch']
  #allocation2 [shape = 'f32[1]{0:T(128)S(6)}', space=smem, size = 0x200, scoped, tag = 'scoped memory for tpu_custom_call.1']
  %s0 = inlined_call_operand.vmem [shape: f32[8,1,32], index: 0, kind: input, shape index: {}]
  %s1 = inlined_call_operand.vmem [shape: bf16[64,128], index: 1, kind: input, shape index: {}]
  %s2 = inlined_call_operand.vmem [shape: f32[1,128], index: 2, kind: input, shape index: {}]
  %s3 = inlined_call_operand.vmem [shape: bf16[32,192], index: 3, kind: input, shape index: {}]
  %s4 = inlined_call_operand.vmem [shape: bf16[192,32], index: 4, kind: input, shape index: {}]
  %s5 = inlined_call_operand.vmem [shape: f32[4,16], index: 5, kind: input, shape index: {}]
  %s6 = inlined_call_operand.vmem [shape: bf16[16,32], index: 6, kind: input, shape index: {}]
  %s7 = inlined_call_operand.<no memory space> [shape: f32[1], index: 7, kind: input, shape index: {}]
  %s8 = inlined_call_operand.hbm [shape: f32[1,4], index: 8, kind: output, shape index: {}]
  %s9 = sld [smem:[#allocation0]]
  $region42: #{tpu_custom_call.1} parent=0
    _
  %s11 = ssub.s32 1, %s9
  %s12 = scalar_select 0, %s11, %s9
  %13 = sst [smem:[#allocation2]] %s7
  $region1: #{tpu_custom_call.1} parent=0
    #allocation3 [shape = 'u8[512]{0}', space=vmem, size = 0x400, scoped, tag = 'output window, operand 0, single buffered']
    #allocation4 [shape = 's32[1]{0}', space=sflag, size = 0x4, scoped, tag = 'scoped memory for tpu_custom_call.1']
    %14 = vsyncpa [#allocation4], 0
    // Predicated region
    $region2: #{tpu_custom_call.1} parent=1 // pred_check
      _
    $region3: #{tpu_custom_call.1} parent=1 // pred_check_branch
      %16 = sbr.rel (0) target = $region5
    $region4: #{tpu_custom_call.1} parent=1 // pred_region
      _
    $region5: #{tpu_custom_call.1} parent=1 // pred_fallthru
      _
    // Predicated region
    $region6: #{tpu_custom_call.1} parent=1 // pred_check
      _
    $region7: #{tpu_custom_call.1} parent=1 // pred_check_branch
      %18 = sbr.rel (0) target = $region9
    $region8: #{tpu_custom_call.1} parent=1 // pred_region
      _
    $region9: #{tpu_custom_call.1} parent=1 // pred_fallthru
      _
    // Predicated region
    $region10: #{tpu_custom_call.1} parent=1 // pred_check
      _
    $region11: #{tpu_custom_call.1} parent=1 // pred_check_branch
      %20 = sbr.rel (0) target = $region13
    $region12: #{tpu_custom_call.1} parent=1 // pred_region
      _
    $region13: #{tpu_custom_call.1} parent=1 // pred_fallthru
      _
    // Predicated region
    $region14: #{tpu_custom_call.1} parent=1 // pred_check
      _
    $region15: #{tpu_custom_call.1} parent=1 // pred_check_branch
      %22 = sbr.rel (0) target = $region17
    $region16: #{tpu_custom_call.1} parent=1 // pred_region
      _
    $region17: #{tpu_custom_call.1} parent=1 // pred_fallthru
      _
    // Predicated region
    $region18: #{tpu_custom_call.1} parent=1 // pred_check
      _
    $region19: #{tpu_custom_call.1} parent=1 // pred_check_branch
      %24 = sbr.rel (0) target = $region21
    $region20: #{tpu_custom_call.1} parent=1 // pred_region
      _
    $region21: #{tpu_custom_call.1} parent=1 // pred_fallthru
      _
    // Predicated region
    $region22: #{tpu_custom_call.1} parent=1 // pred_check
      _
    $region23: #{tpu_custom_call.1} parent=1 // pred_check_branch
      %26 = sbr.rel (0) target = $region25
    $region24: #{tpu_custom_call.1} parent=1 // pred_region
      _
    $region25: #{tpu_custom_call.1} parent=1 // pred_fallthru
      _
    // Predicated region
    $region26: #{tpu_custom_call.1} parent=1 // pred_check
      _
    $region27: #{tpu_custom_call.1} parent=1 // pred_check_branch
      %28 = sbr.rel (0) target = $region29
    $region28: #{tpu_custom_call.1} parent=1 // pred_region
      _
    $region29: #{tpu_custom_call.1} parent=1 // pred_fallthru
      _
    // Predicated region
    $region30: #{tpu_custom_call.1} parent=1 // pred_check
      _
    $region31: #{tpu_custom_call.1} parent=1 // pred_check_branch
      %30 = sbr.rel (0) target = $region33
    $region32: #{tpu_custom_call.1} parent=1 // pred_region
      _
    $region33: #{tpu_custom_call.1} parent=1 // pred_fallthru
      _
    %v32 = vld [vmem:[%s1] sm:$0xf]
    %v33 = vld [vmem:[%s1 + $0x4] sm:$0xf]
    %v34 = vld [vmem:[%s1 + $0x8] sm:$0xf]
    %v35 = vld [vmem:[%s1 + $0xc] sm:$0xf]
    %v36 = vld [vmem:[%s1 + $0x10] sm:$0xf]
    %v37 = vld [vmem:[%s1 + $0x14] sm:$0xf]
    %v38 = vld [vmem:[%s1 + $0x18] sm:$0xf]
    %v39 = vld [vmem:[%s1 + $0x1c] sm:$0xf]
    %v40 = vld [vmem:[%s2] sm:$0x1]
    %v41 = vld [vmem:[%s0] sm:$0x1]
    %vm42 = vcmask 261120
    %v43 = vsel %vm42, %v41, 0.0
    %v44 = vpack.c.bf16 %v43, %v43
    %v53 = vunpack.c.l.b16 %v32
    %v54 = vunpack.c.l.b16 %v33
    %v55 = vunpack.c.l.b16 %v34
    %v56 = vunpack.c.l.b16 %v35
    %v57 = vunpack.c.l.b16 %v36
    %v58 = vunpack.c.l.b16 %v37
    %v59 = vunpack.c.l.b16 %v38
    %v60 = vunpack.c.l.b16 %v39
    %v61 = vpack.c.b16 %v54, %v53
    %v62 = vpack.c.b16 %v56, %v55
    %v63 = vpack.c.b16 %v58, %v57
    %v64 = vpack.c.b16 %v60, %v59
    %vm69 = vcmask 523264
    %v71 = vsel %vm69, %v44, 0
    %73 = vmatprep.subr.bf16.mxu0 0
    %74 = vmatpush1.bf16.msra.mxu0 %v61
    %75 = vmatprep.subr.bf16.mxu0 0
    %76 = vmatpush1.bf16.msra.mxu0 %v62
    %77 = vmatprep.subr.bf16.mxu0 0
    %78 = vmatpush1.bf16.msra.mxu0 %v63
    %79 = vmatprep.subr.bf16.mxu0 0
    %80 = vmatpush1.bf16.msra.mxu0 %v64
    %81 = vmatprep.subr.bf16.mxu0 0
    %82 = vmatpush1.bf16.msra.mxu0 0
    %83 = vmatprep.subr.bf16.mxu0 0
    %84 = vmatpush1.bf16.msra.mxu0 0
    %85 = vmatprep.subr.bf16.mxu0 0
    %86 = vmatpush1.bf16.msra.mxu0 0
    %87 = vmatprep.subr.bf16.mxu0 0
    %88 = vmatpush1.bf16.msra.mxu0 0
    %89 = vmatprep.subr.bf16.mxu0 0
    %90 = vmatpush1.bf16.msra.mxu0 0
    %91 = vmatprep.subr.bf16.mxu0 0
    %92 = vmatpush1.bf16.msra.mxu0 0
    %93 = vmatprep.subr.bf16.mxu0 0
    %94 = vmatpush1.bf16.msra.mxu0 0
    %95 = vmatprep.subr.bf16.mxu0 0
    %96 = vmatpush1.bf16.msra.mxu0 0
    %97 = vmatprep.subr.bf16.mxu0 0
    %98 = vmatpush1.bf16.msra.mxu0 0
    %99 = vmatprep.subr.bf16.mxu0 0
    %100 = vmatpush1.bf16.msra.mxu0 0
    %101 = vmatprep.subr.bf16.mxu0 0
    %102 = vmatpush1.bf16.msra.mxu0 0
    %103 = vmatprep.subr.bf16.mxu0 0
    %104 = vmatpush1.bf16.msra.mxu0 0
    %105 = vmatprep.mubr.bf16.mxu0 0
    %106 = vmatmul.mubr.bf16.gmra.mrb[0].mxu0 %v71
    %v107 = vpop.f32.mrb[0].mxu0
    %v108 = vadd.f32 %v40, %v107
    %v109 = vpop.f32.mrb[0].mxu0
    %v110 = vpop.f32.mrb[0].mxu0
    %v111 = vpop.f32.mrb[0].mxu0
    %112 = vdwg.mxu0
    %v113 = vxor.u32 %v108, 2147483648
    %v114 = vmul.f32 %v113, 1.442695
    %v115 = vpow.pop %v114
    %v116 = vadd.f32 %v115, 1.0
    %v117 = vrcp.pop %v116
    %v118 = vmul.f32 1.0, %v117
    %v119 = vtanh.pop %v108
    %v120 = vmul.f32 %v118, 0.0
    %122 = vrot.lane.b32.xlu0 %v119, 64
    %v123 = vpop.permute.xlu0 %122
    %v125 = vmul.f32 %v118, %v123
    %127 = vrot.lane.b32.xlu0 %v125, 32
    %v128 = vpop.permute.xlu0 %127
    %v130 = vadd.f32 %v120, %v128
    %v131 = vtanh.pop %v130
    %133 = vrot.lane.b32.xlu0 %v131, 64
    %v134 = vpop.permute.xlu0 %133
    %v136 = vmul.f32 %v118, %v134
    %s137 = scalar_lea.vmem %s0, 1
    %v138 = vld [vmem:[%s137] sm:$0x1]
    %140 = vrot.lane.b32.xlu0 %v136, 64
    %v141 = vpop.permute.xlu0 %140
    %v143 = vsel %vm42, %v138, %v141
    %v144 = vpack.c.bf16 %v143, %v143
    %v146 = vsel %vm69, %v144, 0
    %148 = vmatprep.subr.bf16.mxu0 0
    %149 = vmatpush1.bf16.msra.mxu0 %v61
    %150 = vmatprep.subr.bf16.mxu0 0
    %151 = vmatpush1.bf16.msra.mxu0 %v62
    %152 = vmatprep.subr.bf16.mxu0 0
    %153 = vmatpush1.bf16.msra.mxu0 %v63
    %154 = vmatprep.subr.bf16.mxu0 0
    %155 = vmatpush1.bf16.msra.mxu0 %v64
    %156 = vmatprep.subr.bf16.mxu0 0
    %157 = vmatpush1.bf16.msra.mxu0 0
    %158 = vmatprep.subr.bf16.mxu0 0
    %159 = vmatpush1.bf16.msra.mxu0 0
    %160 = vmatprep.subr.bf16.mxu0 0
    %161 = vmatpush1.bf16.msra.mxu0 0
    %162 = vmatprep.subr.bf16.mxu0 0
    %163 = vmatpush1.bf16.msra.mxu0 0
    %164 = vmatprep.subr.bf16.mxu0 0
    %165 = vmatpush1.bf16.msra.mxu0 0
    %166 = vmatprep.subr.bf16.mxu0 0
    %167 = vmatpush1.bf16.msra.mxu0 0
    %168 = vmatprep.subr.bf16.mxu0 0
    %169 = vmatpush1.bf16.msra.mxu0 0
    %170 = vmatprep.subr.bf16.mxu0 0
    %171 = vmatpush1.bf16.msra.mxu0 0
    %172 = vmatprep.subr.bf16.mxu0 0
    %173 = vmatpush1.bf16.msra.mxu0 0
    %174 = vmatprep.subr.bf16.mxu0 0
    %175 = vmatpush1.bf16.msra.mxu0 0
    %176 = vmatprep.subr.bf16.mxu0 0
    %177 = vmatpush1.bf16.msra.mxu0 0
    %178 = vmatprep.subr.bf16.mxu0 0
    %179 = vmatpush1.bf16.msra.mxu0 0
    %180 = vmatprep.mubr.bf16.mxu0 0
    %181 = vmatmul.mubr.bf16.gmra.mrb[0].mxu0 %v146
    %v182 = vpop.f32.mrb[0].mxu0
    %v183 = vadd.f32 %v40, %v182
    %v184 = vpop.f32.mrb[0].mxu0
    %v185 = vpop.f32.mrb[0].mxu0
    %v186 = vpop.f32.mrb[0].mxu0
    %187 = vdwg.mxu0
    %v188 = vxor.u32 %v183, 2147483648
    %v189 = vmul.f32 %v188, 1.442695
    %v190 = vpow.pop %v189
    %v191 = vadd.f32 %v190, 1.0
    %v192 = vrcp.pop %v191
    %v193 = vmul.f32 1.0, %v192
    %v194 = vtanh.pop %v183
    %v195 = vmul.f32 %v193, %v130
    %197 = vrot.lane.b32.xlu0 %v194, 64
    %v198 = vpop.permute.xlu0 %197
    %v200 = vmul.f32 %v193, %v198
    %202 = vrot.lane.b32.xlu0 %v200, 32
    %v203 = vpop.permute.xlu0 %202
    %v205 = vadd.f32 %v195, %v203
    %v206 = vtanh.pop %v205
    %208 = vrot.lane.b32.xlu0 %v206, 64
    %v209 = vpop.permute.xlu0 %208
    %v211 = vmul.f32 %v193, %v209
    %s212 = scalar_lea.vmem %s0, 2
    %v213 = vld [vmem:[%s212] sm:$0x1]
    %215 = vrot.lane.b32.xlu0 %v211, 64
    %v216 = vpop.permute.xlu0 %215
    %v218 = vsel %vm42, %v213, %v216
    %v219 = vpack.c.bf16 %v218, %v218
    %v221 = vsel %vm69, %v219, 0
    %223 = vmatprep.subr.bf16.mxu0 0
    %224 = vmatpush1.bf16.msra.mxu0 %v61
    %225 = vmatprep.subr.bf16.mxu0 0
    %226 = vmatpush1.bf16.msra.mxu0 %v62
    %227 = vmatprep.subr.bf16.mxu0 0
    %228 = vmatpush1.bf16.msra.mxu0 %v63
    %229 = vmatprep.subr.bf16.mxu0 0
    %230 = vmatpush1.bf16.msra.mxu0 %v64
    %231 = vmatprep.subr.bf16.mxu0 0
    %232 = vmatpush1.bf16.msra.mxu0 0
    %233 = vmatprep.subr.bf16.mxu0 0
    %234 = vmatpush1.bf16.msra.mxu0 0
    %235 = vmatprep.subr.bf16.mxu0 0
    %236 = vmatpush1.bf16.msra.mxu0 0
    %237 = vmatprep.subr.bf16.mxu0 0
    %238 = vmatpush1.bf16.msra.mxu0 0
    %239 = vmatprep.subr.bf16.mxu0 0
    %240 = vmatpush1.bf16.msra.mxu0 0
    %241 = vmatprep.subr.bf16.mxu0 0
    %242 = vmatpush1.bf16.msra.mxu0 0
    %243 = vmatprep.subr.bf16.mxu0 0
    %244 = vmatpush1.bf16.msra.mxu0 0
    %245 = vmatprep.subr.bf16.mxu0 0
    %246 = vmatpush1.bf16.msra.mxu0 0
    %247 = vmatprep.subr.bf16.mxu0 0
    %248 = vmatpush1.bf16.msra.mxu0 0
    %249 = vmatprep.subr.bf16.mxu0 0
    %250 = vmatpush1.bf16.msra.mxu0 0
    %251 = vmatprep.subr.bf16.mxu0 0
    %252 = vmatpush1.bf16.msra.mxu0 0
    %253 = vmatprep.subr.bf16.mxu0 0
    %254 = vmatpush1.bf16.msra.mxu0 0
    %255 = vmatprep.mubr.bf16.mxu0 0
    %256 = vmatmul.mubr.bf16.gmra.mrb[0].mxu0 %v221
    %v257 = vpop.f32.mrb[0].mxu0
    %v258 = vadd.f32 %v40, %v257
    %v259 = vpop.f32.mrb[0].mxu0
    %v260 = vpop.f32.mrb[0].mxu0
    %v261 = vpop.f32.mrb[0].mxu0
    %262 = vdwg.mxu0
    %v263 = vxor.u32 %v258, 2147483648
    %v264 = vmul.f32 %v263, 1.442695
    %v265 = vpow.pop %v264
    %v266 = vadd.f32 %v265, 1.0
    %v267 = vrcp.pop %v266
    %v268 = vmul.f32 1.0, %v267
    %v269 = vtanh.pop %v258
    %v270 = vmul.f32 %v268, %v205
    %272 = vrot.lane.b32.xlu0 %v269, 64
    %v273 = vpop.permute.xlu0 %272
    %v275 = vmul.f32 %v268, %v273
    %277 = vrot.lane.b32.xlu0 %v275, 32
    %v278 = vpop.permute.xlu0 %277
    %v280 = vadd.f32 %v270, %v278
    %v281 = vtanh.pop %v280
    %283 = vrot.lane.b32.xlu0 %v281, 64
    %v284 = vpop.permute.xlu0 %283
    %v286 = vmul.f32 %v268, %v284
    %s287 = scalar_lea.vmem %s0, 3
    %v288 = vld [vmem:[%s287] sm:$0x1]
    %290 = vrot.lane.b32.xlu0 %v286, 64
    %v291 = vpop.permute.xlu0 %290
    %v293 = vsel %vm42, %v288, %v291
    %v294 = vpack.c.bf16 %v293, %v293
    %v296 = vsel %vm69, %v294, 0
    %298 = vmatprep.subr.bf16.mxu0 0
    %299 = vmatpush1.bf16.msra.mxu0 %v61
    %300 = vmatprep.subr.bf16.mxu0 0
    %301 = vmatpush1.bf16.msra.mxu0 %v62
    %302 = vmatprep.subr.bf16.mxu0 0
    %303 = vmatpush1.bf16.msra.mxu0 %v63
    %304 = vmatprep.subr.bf16.mxu0 0
    %305 = vmatpush1.bf16.msra.mxu0 %v64
    %306 = vmatprep.subr.bf16.mxu0 0
    %307 = vmatpush1.bf16.msra.mxu0 0
    %308 = vmatprep.subr.bf16.mxu0 0
    %309 = vmatpush1.bf16.msra.mxu0 0
    %310 = vmatprep.subr.bf16.mxu0 0
    %311 = vmatpush1.bf16.msra.mxu0 0
    %312 = vmatprep.subr.bf16.mxu0 0
    %313 = vmatpush1.bf16.msra.mxu0 0
    %314 = vmatprep.subr.bf16.mxu0 0
    %315 = vmatpush1.bf16.msra.mxu0 0
    %316 = vmatprep.subr.bf16.mxu0 0
    %317 = vmatpush1.bf16.msra.mxu0 0
    %318 = vmatprep.subr.bf16.mxu0 0
    %319 = vmatpush1.bf16.msra.mxu0 0
    %320 = vmatprep.subr.bf16.mxu0 0
    %321 = vmatpush1.bf16.msra.mxu0 0
    %322 = vmatprep.subr.bf16.mxu0 0
    %323 = vmatpush1.bf16.msra.mxu0 0
    %324 = vmatprep.subr.bf16.mxu0 0
    %325 = vmatpush1.bf16.msra.mxu0 0
    %326 = vmatprep.subr.bf16.mxu0 0
    %327 = vmatpush1.bf16.msra.mxu0 0
    %328 = vmatprep.subr.bf16.mxu0 0
    %329 = vmatpush1.bf16.msra.mxu0 0
    %330 = vmatprep.mubr.bf16.mxu0 0
    %331 = vmatmul.mubr.bf16.gmra.mrb[0].mxu0 %v296
    %v332 = vpop.f32.mrb[0].mxu0
    %v333 = vadd.f32 %v40, %v332
    %v334 = vpop.f32.mrb[0].mxu0
    %v335 = vpop.f32.mrb[0].mxu0
    %v336 = vpop.f32.mrb[0].mxu0
    %337 = vdwg.mxu0
    %v338 = vxor.u32 %v333, 2147483648
    %v339 = vmul.f32 %v338, 1.442695
    %v340 = vpow.pop %v339
    %v341 = vadd.f32 %v340, 1.0
    %v342 = vrcp.pop %v341
    %v343 = vmul.f32 1.0, %v342
    %v344 = vtanh.pop %v333
    %v345 = vmul.f32 %v343, %v280
    %347 = vrot.lane.b32.xlu0 %v344, 64
    %v348 = vpop.permute.xlu0 %347
    %v350 = vmul.f32 %v343, %v348
    %352 = vrot.lane.b32.xlu0 %v350, 32
    %v353 = vpop.permute.xlu0 %352
    %v355 = vadd.f32 %v345, %v353
    %v356 = vtanh.pop %v355
    %358 = vrot.lane.b32.xlu0 %v356, 64
    %v359 = vpop.permute.xlu0 %358
    %v361 = vmul.f32 %v343, %v359
    %s362 = scalar_lea.vmem %s0, 4
    %v363 = vld [vmem:[%s362] sm:$0x1]
    %365 = vrot.lane.b32.xlu0 %v361, 64
    %v366 = vpop.permute.xlu0 %365
    %v368 = vsel %vm42, %v363, %v366
    %v369 = vpack.c.bf16 %v368, %v368
    %v371 = vsel %vm69, %v369, 0
    %373 = vmatprep.subr.bf16.mxu0 0
    %374 = vmatpush1.bf16.msra.mxu0 %v61
    %375 = vmatprep.subr.bf16.mxu0 0
    %376 = vmatpush1.bf16.msra.mxu0 %v62
    %377 = vmatprep.subr.bf16.mxu0 0
    %378 = vmatpush1.bf16.msra.mxu0 %v63
    %379 = vmatprep.subr.bf16.mxu0 0
    %380 = vmatpush1.bf16.msra.mxu0 %v64
    %381 = vmatprep.subr.bf16.mxu0 0
    %382 = vmatpush1.bf16.msra.mxu0 0
    %383 = vmatprep.subr.bf16.mxu0 0
    %384 = vmatpush1.bf16.msra.mxu0 0
    %385 = vmatprep.subr.bf16.mxu0 0
    %386 = vmatpush1.bf16.msra.mxu0 0
    %387 = vmatprep.subr.bf16.mxu0 0
    %388 = vmatpush1.bf16.msra.mxu0 0
    %389 = vmatprep.subr.bf16.mxu0 0
    %390 = vmatpush1.bf16.msra.mxu0 0
    %391 = vmatprep.subr.bf16.mxu0 0
    %392 = vmatpush1.bf16.msra.mxu0 0
    %393 = vmatprep.subr.bf16.mxu0 0
    %394 = vmatpush1.bf16.msra.mxu0 0
    %395 = vmatprep.subr.bf16.mxu0 0
    %396 = vmatpush1.bf16.msra.mxu0 0
    %397 = vmatprep.subr.bf16.mxu0 0
    %398 = vmatpush1.bf16.msra.mxu0 0
    %399 = vmatprep.subr.bf16.mxu0 0
    %400 = vmatpush1.bf16.msra.mxu0 0
    %401 = vmatprep.subr.bf16.mxu0 0
    %402 = vmatpush1.bf16.msra.mxu0 0
    %403 = vmatprep.subr.bf16.mxu0 0
    %404 = vmatpush1.bf16.msra.mxu0 0
    %405 = vmatprep.mubr.bf16.mxu0 0
    %406 = vmatmul.mubr.bf16.gmra.mrb[0].mxu0 %v371
    %v407 = vpop.f32.mrb[0].mxu0
    %v408 = vadd.f32 %v40, %v407
    %v409 = vpop.f32.mrb[0].mxu0
    %v410 = vpop.f32.mrb[0].mxu0
    %v411 = vpop.f32.mrb[0].mxu0
    %412 = vdwg.mxu0
    %v413 = vxor.u32 %v408, 2147483648
    %v414 = vmul.f32 %v413, 1.442695
    %v415 = vpow.pop %v414
    %v416 = vadd.f32 %v415, 1.0
    %v417 = vrcp.pop %v416
    %v418 = vmul.f32 1.0, %v417
    %v419 = vtanh.pop %v408
    %v420 = vmul.f32 %v418, %v355
    %422 = vrot.lane.b32.xlu0 %v419, 64
    %v423 = vpop.permute.xlu0 %422
    %v425 = vmul.f32 %v418, %v423
    %427 = vrot.lane.b32.xlu0 %v425, 32
    %v428 = vpop.permute.xlu0 %427
    %v430 = vadd.f32 %v420, %v428
    %v431 = vtanh.pop %v430
    %433 = vrot.lane.b32.xlu0 %v431, 64
    %v434 = vpop.permute.xlu0 %433
    %v436 = vmul.f32 %v418, %v434
    %s437 = scalar_lea.vmem %s0, 5
    %v438 = vld [vmem:[%s437] sm:$0x1]
    %440 = vrot.lane.b32.xlu0 %v436, 64
    %v441 = vpop.permute.xlu0 %440
    %v443 = vsel %vm42, %v438, %v441
    %v444 = vpack.c.bf16 %v443, %v443
    %v446 = vsel %vm69, %v444, 0
    %448 = vmatprep.subr.bf16.mxu0 0
    %449 = vmatpush1.bf16.msra.mxu0 %v61
    %450 = vmatprep.subr.bf16.mxu0 0
    %451 = vmatpush1.bf16.msra.mxu0 %v62
    %452 = vmatprep.subr.bf16.mxu0 0
    %453 = vmatpush1.bf16.msra.mxu0 %v63
    %454 = vmatprep.subr.bf16.mxu0 0
    %455 = vmatpush1.bf16.msra.mxu0 %v64
    %456 = vmatprep.subr.bf16.mxu0 0
    %457 = vmatpush1.bf16.msra.mxu0 0
    %458 = vmatprep.subr.bf16.mxu0 0
    %459 = vmatpush1.bf16.msra.mxu0 0
    %460 = vmatprep.subr.bf16.mxu0 0
    %461 = vmatpush1.bf16.msra.mxu0 0
    %462 = vmatprep.subr.bf16.mxu0 0
    %463 = vmatpush1.bf16.msra.mxu0 0
    %464 = vmatprep.subr.bf16.mxu0 0
    %465 = vmatpush1.bf16.msra.mxu0 0
    %466 = vmatprep.subr.bf16.mxu0 0
    %467 = vmatpush1.bf16.msra.mxu0 0
    %468 = vmatprep.subr.bf16.mxu0 0
    %469 = vmatpush1.bf16.msra.mxu0 0
    %470 = vmatprep.subr.bf16.mxu0 0
    %471 = vmatpush1.bf16.msra.mxu0 0
    %472 = vmatprep.subr.bf16.mxu0 0
    %473 = vmatpush1.bf16.msra.mxu0 0
    %474 = vmatprep.subr.bf16.mxu0 0
    %475 = vmatpush1.bf16.msra.mxu0 0
    %476 = vmatprep.subr.bf16.mxu0 0
    %477 = vmatpush1.bf16.msra.mxu0 0
    %478 = vmatprep.subr.bf16.mxu0 0
    %479 = vmatpush1.bf16.msra.mxu0 0
    %480 = vmatprep.mubr.bf16.mxu0 0
    %481 = vmatmul.mubr.bf16.gmra.mrb[0].mxu0 %v446
    %v482 = vpop.f32.mrb[0].mxu0
    %v483 = vadd.f32 %v40, %v482
    %v484 = vpop.f32.mrb[0].mxu0
    %v485 = vpop.f32.mrb[0].mxu0
    %v486 = vpop.f32.mrb[0].mxu0
    %487 = vdwg.mxu0
    %v488 = vxor.u32 %v483, 2147483648
    %v489 = vmul.f32 %v488, 1.442695
    %v490 = vpow.pop %v489
    %v491 = vadd.f32 %v490, 1.0
    %v492 = vrcp.pop %v491
    %v493 = vmul.f32 1.0, %v492
    %v494 = vtanh.pop %v483
    %v495 = vmul.f32 %v493, %v430
    %497 = vrot.lane.b32.xlu0 %v494, 64
    %v498 = vpop.permute.xlu0 %497
    %v500 = vmul.f32 %v493, %v498
    %502 = vrot.lane.b32.xlu0 %v500, 32
    %v503 = vpop.permute.xlu0 %502
    %v505 = vadd.f32 %v495, %v503
    %v506 = vtanh.pop %v505
    %508 = vrot.lane.b32.xlu0 %v506, 64
    %v509 = vpop.permute.xlu0 %508
    %v511 = vmul.f32 %v493, %v509
    %s512 = scalar_lea.vmem %s0, 6
    %v513 = vld [vmem:[%s512] sm:$0x1]
    %515 = vrot.lane.b32.xlu0 %v511, 64
    %v516 = vpop.permute.xlu0 %515
    %v518 = vsel %vm42, %v513, %v516
    %v519 = vpack.c.bf16 %v518, %v518
    %v521 = vsel %vm69, %v519, 0
    %523 = vmatprep.subr.bf16.mxu0 0
    %524 = vmatpush1.bf16.msra.mxu0 %v61
    %525 = vmatprep.subr.bf16.mxu0 0
    %526 = vmatpush1.bf16.msra.mxu0 %v62
    %527 = vmatprep.subr.bf16.mxu0 0
    %528 = vmatpush1.bf16.msra.mxu0 %v63
    %529 = vmatprep.subr.bf16.mxu0 0
    %530 = vmatpush1.bf16.msra.mxu0 %v64
    %531 = vmatprep.subr.bf16.mxu0 0
    %532 = vmatpush1.bf16.msra.mxu0 0
    %533 = vmatprep.subr.bf16.mxu0 0
    %534 = vmatpush1.bf16.msra.mxu0 0
    %535 = vmatprep.subr.bf16.mxu0 0
    %536 = vmatpush1.bf16.msra.mxu0 0
    %537 = vmatprep.subr.bf16.mxu0 0
    %538 = vmatpush1.bf16.msra.mxu0 0
    %539 = vmatprep.subr.bf16.mxu0 0
    %540 = vmatpush1.bf16.msra.mxu0 0
    %541 = vmatprep.subr.bf16.mxu0 0
    %542 = vmatpush1.bf16.msra.mxu0 0
    %543 = vmatprep.subr.bf16.mxu0 0
    %544 = vmatpush1.bf16.msra.mxu0 0
    %545 = vmatprep.subr.bf16.mxu0 0
    %546 = vmatpush1.bf16.msra.mxu0 0
    %547 = vmatprep.subr.bf16.mxu0 0
    %548 = vmatpush1.bf16.msra.mxu0 0
    %549 = vmatprep.subr.bf16.mxu0 0
    %550 = vmatpush1.bf16.msra.mxu0 0
    %551 = vmatprep.subr.bf16.mxu0 0
    %552 = vmatpush1.bf16.msra.mxu0 0
    %553 = vmatprep.subr.bf16.mxu0 0
    %554 = vmatpush1.bf16.msra.mxu0 0
    %555 = vmatprep.mubr.bf16.mxu0 0
    %556 = vmatmul.mubr.bf16.gmra.mrb[0].mxu0 %v521
    %v557 = vpop.f32.mrb[0].mxu0
    %v558 = vadd.f32 %v40, %v557
    %v559 = vpop.f32.mrb[0].mxu0
    %v560 = vpop.f32.mrb[0].mxu0
    %v561 = vpop.f32.mrb[0].mxu0
    %562 = vdwg.mxu0
    %v563 = vxor.u32 %v558, 2147483648
    %v564 = vmul.f32 %v563, 1.442695
    %v565 = vpow.pop %v564
    %v566 = vadd.f32 %v565, 1.0
    %v567 = vrcp.pop %v566
    %v568 = vmul.f32 1.0, %v567
    %v569 = vtanh.pop %v558
    %v570 = vmul.f32 %v568, %v505
    %572 = vrot.lane.b32.xlu0 %v569, 64
    %v573 = vpop.permute.xlu0 %572
    %v575 = vmul.f32 %v568, %v573
    %577 = vrot.lane.b32.xlu0 %v575, 32
    %v578 = vpop.permute.xlu0 %577
    %v580 = vadd.f32 %v570, %v578
    %v581 = vtanh.pop %v580
    %583 = vrot.lane.b32.xlu0 %v581, 64
    %v584 = vpop.permute.xlu0 %583
    %v586 = vmul.f32 %v568, %v584
    %s587 = scalar_lea.vmem %s0, 7
    %v588 = vld [vmem:[%s587] sm:$0x1]
    %590 = vrot.lane.b32.xlu0 %v586, 64
    %v591 = vpop.permute.xlu0 %590
    %v593 = vsel %vm42, %v588, %v591
    %v594 = vpack.c.bf16 %v593, %v593
    %v596 = vsel %vm69, %v594, 0
    %598 = vmatprep.subr.bf16.mxu0 0
    %599 = vmatpush1.bf16.msra.mxu0 %v61
    %600 = vmatprep.subr.bf16.mxu0 0
    %601 = vmatpush1.bf16.msra.mxu0 %v62
    %602 = vmatprep.subr.bf16.mxu0 0
    %603 = vmatpush1.bf16.msra.mxu0 %v63
    %604 = vmatprep.subr.bf16.mxu0 0
    %605 = vmatpush1.bf16.msra.mxu0 %v64
    %606 = vmatprep.subr.bf16.mxu0 0
    %607 = vmatpush1.bf16.msra.mxu0 0
    %608 = vmatprep.subr.bf16.mxu0 0
    %609 = vmatpush1.bf16.msra.mxu0 0
    %610 = vmatprep.subr.bf16.mxu0 0
    %611 = vmatpush1.bf16.msra.mxu0 0
    %612 = vmatprep.subr.bf16.mxu0 0
    %613 = vmatpush1.bf16.msra.mxu0 0
    %614 = vmatprep.subr.bf16.mxu0 0
    %615 = vmatpush1.bf16.msra.mxu0 0
    %616 = vmatprep.subr.bf16.mxu0 0
    %617 = vmatpush1.bf16.msra.mxu0 0
    %618 = vmatprep.subr.bf16.mxu0 0
    %619 = vmatpush1.bf16.msra.mxu0 0
    %620 = vmatprep.subr.bf16.mxu0 0
    %621 = vmatpush1.bf16.msra.mxu0 0
    %622 = vmatprep.subr.bf16.mxu0 0
    %623 = vmatpush1.bf16.msra.mxu0 0
    %624 = vmatprep.subr.bf16.mxu0 0
    %625 = vmatpush1.bf16.msra.mxu0 0
    %626 = vmatprep.subr.bf16.mxu0 0
    %627 = vmatpush1.bf16.msra.mxu0 0
    %628 = vmatprep.subr.bf16.mxu0 0
    %629 = vmatpush1.bf16.msra.mxu0 0
    %630 = vmatprep.mubr.bf16.mxu0 0
    %631 = vmatmul.mubr.bf16.gmra.mrb[0].mxu0 %v596
    %v632 = vpop.f32.mrb[0].mxu0
    %v633 = vadd.f32 %v40, %v632
    %v634 = vpop.f32.mrb[0].mxu0
    %v635 = vpop.f32.mrb[0].mxu0
    %v636 = vpop.f32.mrb[0].mxu0
    %637 = vdwg.mxu0
    %v638 = vxor.u32 %v633, 2147483648
    %v639 = vmul.f32 %v638, 1.442695
    %v640 = vpow.pop %v639
    %v641 = vadd.f32 %v640, 1.0
    %v642 = vrcp.pop %v641
    %v643 = vmul.f32 1.0, %v642
    %v644 = vtanh.pop %v633
    %v645 = vmul.f32 %v643, %v580
    %647 = vrot.lane.b32.xlu0 %v644, 64
    %v648 = vpop.permute.xlu0 %647
    %v650 = vmul.f32 %v643, %v648
    %652 = vrot.lane.b32.xlu0 %v650, 32
    %v653 = vpop.permute.xlu0 %652
    %v655 = vadd.f32 %v645, %v653
    %v656 = vtanh.pop %v655
    %658 = vrot.lane.b32.xlu0 %v656, 64
    %v659 = vpop.permute.xlu0 %658
    %v661 = vmul.f32 %v643, %v659
    %v662 = vpack.c.bf16 %v661, %v661
    %v663 = vld [vmem:[%s3] sm:$0xff]
    %v664 = vld [vmem:[%s3 + $0x8] sm:$0xff]
    %v665 = vld [vmem:[%s3 + $0x10] sm:$0xff]
    %v666 = vld [vmem:[%s3 + $0x18] sm:$0xff]
    %668 = vrot.lane.b32.xlu0 %v662, 32
    %v669 = vpop.permute.xlu0 %668
    %v674 = vunpack.c.l.b16 %v663
    %v675 = vunpack.c.h.b16 %v663
    %v676 = vunpack.c.l.b16 %v664
    %v677 = vunpack.c.h.b16 %v664
    %v678 = vunpack.c.l.b16 %v665
    %v679 = vunpack.c.h.b16 %v665
    %v680 = vunpack.c.l.b16 %v666
    %v681 = vunpack.c.h.b16 %v666
    %v682 = vpack.c.b16 %v676, %v674
    %v683 = vpack.c.b16 %v677, %v675
    %v684 = vpack.c.b16 %v680, %v678
    %v685 = vpack.c.b16 %v681, %v679
    %v691 = vsel %vm42, %v669, 0
    %693 = vmatprep.subr.bf16.mxu0 %v683
    %694 = vmatpush1.bf16.msra.mxu0 %v682
    %695 = vmatprep.subr.bf16.mxu0 %v685
    %696 = vmatpush1.bf16.msra.mxu0 %v684
    %697 = vmatprep.subr.bf16.mxu0 0
    %698 = vmatpush1.bf16.msra.mxu0 0
    %699 = vmatprep.subr.bf16.mxu0 0
    %700 = vmatpush1.bf16.msra.mxu0 0
    %701 = vmatprep.subr.bf16.mxu0 0
    %702 = vmatpush1.bf16.msra.mxu0 0
    %703 = vmatprep.subr.bf16.mxu0 0
    %704 = vmatpush1.bf16.msra.mxu0 0
    %705 = vmatprep.subr.bf16.mxu0 0
    %706 = vmatpush1.bf16.msra.mxu0 0
    %707 = vmatprep.subr.bf16.mxu0 0
    %708 = vmatpush1.bf16.msra.mxu0 0
    %709 = vmatprep.subr.bf16.mxu0 0
    %710 = vmatpush1.bf16.msra.mxu0 0
    %711 = vmatprep.subr.bf16.mxu0 0
    %712 = vmatpush1.bf16.msra.mxu0 0
    %713 = vmatprep.subr.bf16.mxu0 0
    %714 = vmatpush1.bf16.msra.mxu0 0
    %715 = vmatprep.subr.bf16.mxu0 0
    %716 = vmatpush1.bf16.msra.mxu0 0
    %717 = vmatprep.subr.bf16.mxu0 0
    %718 = vmatpush1.bf16.msra.mxu0 0
    %719 = vmatprep.subr.bf16.mxu0 0
    %720 = vmatpush1.bf16.msra.mxu0 0
    %721 = vmatprep.subr.bf16.mxu0 0
    %722 = vmatpush1.bf16.msra.mxu0 0
    %723 = vmatprep.subr.bf16.mxu0 0
    %724 = vmatpush1.bf16.msra.mxu0 0
    %725 = vmatprep.mubr.bf16.mxu0 0
    %726 = vmatmul.mubr.bf16.gmra.mrb[0].mxu0 %v691
    %v727 = vpop.f32.mrb[0].mxu0
    %v728 = vadd.f32 0.0, %v727
    %v729 = vpop.f32.mrb[0].mxu0
    %v730 = vadd.f32 0.0, %v729
    %v731 = vpop.f32.mrb[0].mxu0
    %v732 = vpop.f32.mrb[0].mxu0
    %733 = vdwg.mxu0
    %v734 = vpack.c.bf16 %v728, %v728
    %v735 = vpack.c.bf16 %v730, %v730
    %v736 = vld [vmem:[%s4] sm:$0xf]
    %v737 = vld [vmem:[%s4 + $0x4] sm:$0xf]
    %v738 = vld [vmem:[%s4 + $0x8] sm:$0xf]
    %v739 = vld [vmem:[%s4 + $0xc] sm:$0xf]
    %v740 = vld [vmem:[%s4 + $0x10] sm:$0xf]
    %v741 = vld [vmem:[%s4 + $0x14] sm:$0xf]
    %v742 = vld [vmem:[%s4 + $0x18] sm:$0xf]
    %v743 = vld [vmem:[%s4 + $0x1c] sm:$0xf]
    %v744 = vld [vmem:[%s4 + $0x20] sm:$0xf]
    %v745 = vld [vmem:[%s4 + $0x24] sm:$0xf]
    %v746 = vld [vmem:[%s4 + $0x28] sm:$0xf]
    %v747 = vld [vmem:[%s4 + $0x2c] sm:$0xf]
    %v748 = vld [vmem:[%s4 + $0x30] sm:$0xf]
    %v749 = vld [vmem:[%s4 + $0x34] sm:$0xf]
    %v750 = vld [vmem:[%s4 + $0x38] sm:$0xf]
    %v751 = vld [vmem:[%s4 + $0x3c] sm:$0xf]
    %v752 = vld [vmem:[%s4 + $0x40] sm:$0xf]
    %v753 = vld [vmem:[%s4 + $0x44] sm:$0xf]
    %v754 = vld [vmem:[%s4 + $0x48] sm:$0xf]
    %v755 = vld [vmem:[%s4 + $0x4c] sm:$0xf]
    %v756 = vld [vmem:[%s4 + $0x50] sm:$0xf]
    %v757 = vld [vmem:[%s4 + $0x54] sm:$0xf]
    %v758 = vld [vmem:[%s4 + $0x58] sm:$0xf]
    %v759 = vld [vmem:[%s4 + $0x5c] sm:$0xf]
    %v784 = vunpack.c.l.b16 %v736
    %v785 = vunpack.c.l.b16 %v737
    %v786 = vunpack.c.l.b16 %v738
    %v787 = vunpack.c.l.b16 %v739
    %v788 = vunpack.c.l.b16 %v740
    %v789 = vunpack.c.l.b16 %v741
    %v790 = vunpack.c.l.b16 %v742
    %v791 = vunpack.c.l.b16 %v743
    %v792 = vunpack.c.l.b16 %v744
    %v793 = vunpack.c.l.b16 %v745
    %v794 = vunpack.c.l.b16 %v746
    %v795 = vunpack.c.l.b16 %v747
    %v796 = vunpack.c.l.b16 %v748
    %v797 = vunpack.c.l.b16 %v749
    %v798 = vunpack.c.l.b16 %v750
    %v799 = vunpack.c.l.b16 %v751
    %v800 = vunpack.c.l.b16 %v752
    %v801 = vunpack.c.l.b16 %v753
    %v802 = vunpack.c.l.b16 %v754
    %v803 = vunpack.c.l.b16 %v755
    %v804 = vunpack.c.l.b16 %v756
    %v805 = vunpack.c.l.b16 %v757
    %v806 = vunpack.c.l.b16 %v758
    %v807 = vunpack.c.l.b16 %v759
    %v808 = vpack.c.b16 %v785, %v784
    %v809 = vpack.c.b16 %v787, %v786
    %v810 = vpack.c.b16 %v789, %v788
    %v811 = vpack.c.b16 %v791, %v790
    %v812 = vpack.c.b16 %v793, %v792
    %v813 = vpack.c.b16 %v795, %v794
    %v814 = vpack.c.b16 %v797, %v796
    %v815 = vpack.c.b16 %v799, %v798
    %v816 = vpack.c.b16 %v801, %v800
    %v817 = vpack.c.b16 %v803, %v802
    %v818 = vpack.c.b16 %v805, %v804
    %v819 = vpack.c.b16 %v807, %v806
    %v833 = vsel %vm69, %v735, 0
    %835 = vmatprep.subr.bf16.mxu0 0
    %836 = vmatpush1.bf16.msra.mxu0 %v808
    %837 = vmatprep.subr.bf16.mxu0 0
    %838 = vmatpush1.bf16.msra.mxu0 %v809
    %839 = vmatprep.subr.bf16.mxu0 0
    %840 = vmatpush1.bf16.msra.mxu0 %v810
    %841 = vmatprep.subr.bf16.mxu0 0
    %842 = vmatpush1.bf16.msra.mxu0 %v811
    %843 = vmatprep.subr.bf16.mxu0 0
    %844 = vmatpush1.bf16.msra.mxu0 %v812
    %845 = vmatprep.subr.bf16.mxu0 0
    %846 = vmatpush1.bf16.msra.mxu0 %v813
    %847 = vmatprep.subr.bf16.mxu0 0
    %848 = vmatpush1.bf16.msra.mxu0 %v814
    %849 = vmatprep.subr.bf16.mxu0 0
    %850 = vmatpush1.bf16.msra.mxu0 %v815
    %851 = vmatprep.subr.bf16.mxu0 0
    %852 = vmatpush1.bf16.msra.mxu0 %v816
    %853 = vmatprep.subr.bf16.mxu0 0
    %854 = vmatpush1.bf16.msra.mxu0 %v817
    %855 = vmatprep.subr.bf16.mxu0 0
    %856 = vmatpush1.bf16.msra.mxu0 %v818
    %857 = vmatprep.subr.bf16.mxu0 0
    %858 = vmatpush1.bf16.msra.mxu0 %v819
    %859 = vmatprep.subr.bf16.mxu0 0
    %860 = vmatpush1.bf16.msra.mxu0 0
    %861 = vmatprep.subr.bf16.mxu0 0
    %862 = vmatpush1.bf16.msra.mxu0 0
    %863 = vmatprep.subr.bf16.mxu0 0
    %864 = vmatpush1.bf16.msra.mxu0 0
    %865 = vmatprep.subr.bf16.mxu0 0
    %866 = vmatpush1.bf16.msra.mxu0 0
    %867 = vmatprep.mubr.bf16.mxu0 %v833
    %868 = vmatmul.mubr.bf16.gmra.mrb[0].mxu0 %v734
    %v869 = vpop.f32.mrb[0].mxu0
    %v870 = vadd.f32 0.0, %v869
    %v871 = vpop.f32.mrb[0].mxu0
    %v872 = vpop.f32.mrb[0].mxu0
    %v873 = vpop.f32.mrb[0].mxu0
    %874 = vdwg.mxu0
    %v875 = vld [vmem:[%s5] sm:$0xf]
    %v876 = vpack.c.bf16 %v875, %v875
    %v877 = vld [vmem:[%s6] sm:$0xf]
    %v878 = vld [vmem:[%s6 + $0x4] sm:$0xf]
    %v881 = vunpack.c.l.b16 %v877
    %v882 = vunpack.c.l.b16 %v878
    %v883 = vpack.c.b16 %v882, %v881
    %vm885 = vcmask 130048
    %v887 = vsel %vm885, %v876, 0
    %889 = vmatprep.subr.bf16.mxu0 0
    %890 = vmatpush1.bf16.msra.mxu0 %v883
    %891 = vmatprep.subr.bf16.mxu0 0
    %892 = vmatpush1.bf16.msra.mxu0 0
    %893 = vmatprep.subr.bf16.mxu0 0
    %894 = vmatpush1.bf16.msra.mxu0 0
    %895 = vmatprep.subr.bf16.mxu0 0
    %896 = vmatpush1.bf16.msra.mxu0 0
    %897 = vmatprep.subr.bf16.mxu0 0
    %898 = vmatpush1.bf16.msra.mxu0 0
    %899 = vmatprep.subr.bf16.mxu0 0
    %900 = vmatpush1.bf16.msra.mxu0 0
    %901 = vmatprep.subr.bf16.mxu0 0
    %902 = vmatpush1.bf16.msra.mxu0 0
    %903 = vmatprep.subr.bf16.mxu0 0
    %904 = vmatpush1.bf16.msra.mxu0 0
    %905 = vmatprep.subr.bf16.mxu0 0
    %906 = vmatpush1.bf16.msra.mxu0 0
    %907 = vmatprep.subr.bf16.mxu0 0
    %908 = vmatpush1.bf16.msra.mxu0 0
    %909 = vmatprep.subr.bf16.mxu0 0
    %910 = vmatpush1.bf16.msra.mxu0 0
    %911 = vmatprep.subr.bf16.mxu0 0
    %912 = vmatpush1.bf16.msra.mxu0 0
    %913 = vmatprep.subr.bf16.mxu0 0
    %914 = vmatpush1.bf16.msra.mxu0 0
    %915 = vmatprep.subr.bf16.mxu0 0
    %916 = vmatpush1.bf16.msra.mxu0 0
    %917 = vmatprep.subr.bf16.mxu0 0
    %918 = vmatpush1.bf16.msra.mxu0 0
    %919 = vmatprep.subr.bf16.mxu0 0
    %920 = vmatpush1.bf16.msra.mxu0 0
    %921 = vmatprep.mubr.bf16.mxu0 0
    %922 = vmatmul.mubr.bf16.gmra.mrb[0].mxu0 %v887
    %v923 = vpop.f32.mrb[0].mxu0
    %v924 = vadd.f32 0.0, %v923
    %v925 = vpop.f32.mrb[0].mxu0
    %v926 = vpop.f32.mrb[0].mxu0
    %v927 = vpop.f32.mrb[0].mxu0
    %928 = vdwg.mxu0
    %v929 = vmul.f32 %v870, %v870
    %vm930 = vcmask 253952
    %v931 = vsel %vm930, %v929, 0.0
    %932 = vadd.xlane.f32.xlu0 %v931
    %v933 = vpop.xlane.xlu0 %932
    %v934 = vadd.f32 %v933, 1e-12
    %v935 = vrsqrt.pop %v934
    %v936 = vmul.f32 %v870, %v935
    %v937 = vmul.f32 %v924, %v924
    %vm938 = vcmask 257024
    %v939 = vsel %vm938, %v937, 0.0
    %940 = vadd.xlane.f32.xlu0 %v939
    %v941 = vpop.xlane.xlu0 %940
    %v942 = vadd.f32 %v941, 1e-12
    %v943 = vrsqrt.pop %v942
    %v944 = vmul.f32 %v924, %v943
    %s945 = sld [smem:[#allocation2]]
    %v947 = vsel %vm42, %v936, 0
    %v950 = vsel %vm42, %v944, 0
    %952 = vmatprep.subr.mxu0 0.0
    %953 = vmatpush1.xpose.msra.mxu0 %v950
    %954 = vmatprep.subr.mxu0 0.0
    %955 = vmatpush1.xpose.msra.mxu0 0.0
    %956 = vmatprep.subr.mxu0 0.0
    %957 = vmatpush1.xpose.msra.mxu0 0.0
    %958 = vmatprep.subr.mxu0 0.0
    %959 = vmatpush1.xpose.msra.mxu0 0.0
    %960 = vmatprep.subr.mxu0 0.0
    %961 = vmatpush1.xpose.msra.mxu0 0.0
    %962 = vmatprep.subr.mxu0 0.0
    %963 = vmatpush1.xpose.msra.mxu0 0.0
    %964 = vmatprep.subr.mxu0 0.0
    %965 = vmatpush1.xpose.msra.mxu0 0.0
    %966 = vmatprep.subr.mxu0 0.0
    %967 = vmatpush1.xpose.msra.mxu0 0.0
    %968 = vmatprep.subr.mxu0 0.0
    %969 = vmatpush1.xpose.msra.mxu0 0.0
    %970 = vmatprep.subr.mxu0 0.0
    %971 = vmatpush1.xpose.msra.mxu0 0.0
    %972 = vmatprep.subr.mxu0 0.0
    %973 = vmatpush1.xpose.msra.mxu0 0.0
    %974 = vmatprep.subr.mxu0 0.0
    %975 = vmatpush1.xpose.msra.mxu0 0.0
    %976 = vmatprep.subr.mxu0 0.0
    %977 = vmatpush1.xpose.msra.mxu0 0.0
    %978 = vmatprep.subr.mxu0 0.0
    %979 = vmatpush1.xpose.msra.mxu0 0.0
    %980 = vmatprep.subr.mxu0 0.0
    %981 = vmatpush1.xpose.msra.mxu0 0.0
    %982 = vmatprep.subr.mxu0 0.0
    %983 = vmatpush1.xpose.msra.mxu0 0.0
    %984 = vmatprep.subr.mxu0 0.0
    %985 = vmatpush1.xpose.msra.mxu0 0.0
    %986 = vmatprep.subr.mxu0 0.0
    %987 = vmatpush1.xpose.msra.mxu0 0.0
    %988 = vmatprep.subr.mxu0 0.0
    %989 = vmatpush1.xpose.msra.mxu0 0.0
    %990 = vmatprep.subr.mxu0 0.0
    %991 = vmatpush1.xpose.msra.mxu0 0.0
    %992 = vmatprep.subr.mxu0 0.0
    %993 = vmatpush1.xpose.msra.mxu0 0.0
    %994 = vmatprep.subr.mxu0 0.0
    %995 = vmatpush1.xpose.msra.mxu0 0.0
    %996 = vmatprep.subr.mxu0 0.0
    %997 = vmatpush1.xpose.msra.mxu0 0.0
    %998 = vmatprep.subr.mxu0 0.0
    %999 = vmatpush1.xpose.msra.mxu0 0.0
    %1000 = vmatprep.subr.mxu0 0.0
    %1001 = vmatpush1.xpose.msra.mxu0 0.0
    %1002 = vmatprep.subr.mxu0 0.0
    %1003 = vmatpush1.xpose.msra.mxu0 0.0
    %1004 = vmatprep.subr.mxu0 0.0
    %1005 = vmatpush1.xpose.msra.mxu0 0.0
    %1006 = vmatprep.subr.mxu0 0.0
    %1007 = vmatpush1.xpose.msra.mxu0 0.0
    %1008 = vmatprep.subr.mxu0 0.0
    %1009 = vmatpush1.xpose.msra.mxu0 0.0
    %1010 = vmatprep.subr.mxu0 0.0
    %1011 = vmatpush1.xpose.msra.mxu0 0.0
    %1012 = vmatprep.subr.mxu0 0.0
    %1013 = vmatpush1.xpose.msra.mxu0 0.0
    %1014 = vmatprep.subr.mxu0 0.0
    %1015 = vmatpush1.xpose.msra.mxu0 0.0
    %1016 = vmatprep.mubr.f32.mxu0 0.0
    %1017 = vmatmul.mubr.f32.gmra.mrb[0].mxu0 %v947
    %v1018 = vpop.f32.mrb[0].mxu0
    %v1019 = vadd.f32 0.0, %v1018
    %v1020 = vpop.f32.mrb[0].mxu0
    %1021 = vdwg.mxu0
    %v1022 = vstv %s945
    %v1023 = vmul.f32 %v1022, %v1019
    %vm1024 = vcmask 24576
    %v1025 = vsel %vm1024, %v1023, -inf
    %1026 = vmax.xlane.f32.xlu0 %v1025
    %v1027 = vpop.xlane.xlu0 %1026
    %v1028 = vsub.f32 %v1023, %v1027
    %v1029 = vmul.f32 %v1028, 1.442695
    %v1030 = vpow.pop %v1029
    %v1031 = vsel %vm1024, %v1030, 0.0
    %1032 = vadd.xlane.f32.xlu0 %v1031
    %v1033 = vpop.xlane.xlu0 %1032
    %v1034 = vrcp.pop %v1033
    %v1035 = vmul.f32 %v1030, %v1034
    %1036 = vst.msk [vmem:[#allocation3] sm:$0x1] %vm1024, %v1035
    // Predicated region
    $region34: #{tpu_custom_call.1} parent=1 // pred_check
      _
    $region35: #{tpu_custom_call.1} parent=1 // pred_check_branch
      %1038 = sbr.rel (0) target = $region37
    $region36: #{tpu_custom_call.1} parent=1 // pred_region
      %s1040 = ssub.s32 16, 16
      %1041 = vsyncadd [#allocation4], %s1040
      %s1043 = sshll.u32 [#allocation3], 4
      %s1044 = int_to_ptr.vmem [resolvable:$true] %s1043
      %1046 = dma.vmem_to_hbm [thread:$0]  %s1044, 16, %s8, [#allocation4]
    $region37: #{tpu_custom_call.1} parent=1 // pred_fallthru
      _
    // Predicated region
    $region38: #{tpu_custom_call.1} parent=1 // pred_check
      _
    $region39: #{tpu_custom_call.1} parent=1 // pred_check_branch
      %1048 = sbr.rel (0) target = $region41
    $region40: #{tpu_custom_call.1} parent=1 // pred_region
      %1049 = dma.done [#allocation4], 16
    $region41: #{tpu_custom_call.1} parent=1 // pred_fallthru
      _
    %1050 = vsyncpa [#allocation4], 1

</llo_original>
